<compile_context>
chip_gen: v5e
topology: v5e:2x2
jax: 0.10.0
libtpu: 0.0.40
codegen_flags: <defaults>
</compile_context>

<pallas_src>
import functools

import jax
import jax.numpy as jnp
from jax import lax
from jax.experimental import pallas as pl
from jax.experimental.pallas import tpu as pltpu


# ---------------------------------------------------------------------------
# Glue: pack OIHW 3x3 weights into banded matmul matrices (done once, tiny).
# ---------------------------------------------------------------------------
def _band_weights(w_oihw, W):
    """OIHW (Cout, Cin, 3, 3) -> A of shape (3, W*Cin, W*Cout).

    For a channels-last, width-flattened row matrix X of shape (H+2, W*Cin)
    (rows 0 and H+1 are zero = vertical padding), the 3x3 'same' conv is

        y[h, w*Cout + co] = sum_kh ( X[h + kh, :] @ A[kh] )[w*Cout + co]

    Horizontal taps that fall outside [0, W) are simply left out of the band
    (their entries stay zero), which implements the horizontal zero-padding
    inside the weight matrix itself.
    """
    Cout, Cin, KH, KW = w_oihw.shape
    w_t = jnp.transpose(w_oihw, (2, 3, 1, 0))            # (kh, kw, ci, co)
    mats = []
    for kh in range(KH):
        full = w_t[kh].reshape(KW * Cin, Cout)            # row index = kw*Cin + ci
        cols = []
        for w in range(W):
            start = (w - 1) * Cin                         # global row of (kw=0, ci=0)
            lo, hi = max(start, 0), min(start + KW * Cin, W * Cin)
            block = full[lo - start:hi - start]
            cols.append(jnp.pad(block, ((lo, W * Cin - hi), (0, 0))))
        mats.append(jnp.concatenate(cols, axis=1))        # (W*Cin, W*Cout)
    return jnp.stack(mats)                                # (KH, W*Cin, W*Cout)


# ---------------------------------------------------------------------------
# Fused kernel: pad -> conv1 -> ReLU -> pad -> conv2 -> ReLU, per batch element.
# ---------------------------------------------------------------------------
def _fused_double_conv_kernel(x_ref, w1_ref, w2_ref, o_ref,
                              xpad_ref, midpad_ref, *, H):
    # x_ref      : (1, H, W*Cin)          input rows (channels-last, W in lanes)
    # w1_ref     : (3, W*Cin,  W*Cmid)    banded conv1 weights (one slab per kh)
    # w2_ref     : (3, W*Cmid, W*Cout)    banded conv2 weights
    # o_ref      : (1, H, W*Cout)         lane-dense output rows
    # xpad_ref   : VMEM (H+2, W*Cin)      vertically zero-padded conv1 input
    # midpad_ref : VMEM (H+2, W*Cmid)     vertically zero-padded conv1 output
    wcin = xpad_ref.shape[1]
    wcmid = midpad_ref.shape[1]

    # ---- in-kernel 'same' padding (vertical) for conv1 ----
    # Only the two halo rows need zeroing; the interior is fully overwritten.
    zrow_in = jnp.zeros((1, wcin), jnp.float32)
    xpad_ref[0:1, :] = zrow_in
    xpad_ref[H + 1:H + 2, :] = zrow_in
    xpad_ref[1:H + 1, :] = x_ref[0]

    # ---- conv1 + ReLU: 3 banded MXU matmuls, f32 accumulation ----
    acc1 = jnp.dot(xpad_ref[0:H, :], w1_ref[0],
                   preferred_element_type=jnp.float32)
    for kh in (1, 2):
        acc1 = acc1 + jnp.dot(xpad_ref[kh:kh + H, :], w1_ref[kh],
                              preferred_element_type=jnp.float32)
    mid = jnp.maximum(acc1, 0.0)

    # ---- intermediate stays in VMEM: pad it for conv2 ----
    zrow_mid = jnp.zeros((1, wcmid), jnp.float32)
    midpad_ref[0:1, :] = zrow_mid
    midpad_ref[H + 1:H + 2, :] = zrow_mid
    midpad_ref[1:H + 1, :] = mid

    # ---- conv2 + ReLU ----
    acc2 = jnp.dot(midpad_ref[0:H, :], w2_ref[0],
                   preferred_element_type=jnp.float32)
    for kh in (1, 2):
        acc2 = acc2 + jnp.dot(midpad_ref[kh:kh + H, :], w2_ref[kh],
                              preferred_element_type=jnp.float32)
    o_ref[0] = jnp.maximum(acc2, 0.0).astype(o_ref.dtype)


def _fused_double_conv(x_rows, w1_band, w2_band):
    """x_rows: (B, H, W*Cin); w*_band: (3, W*Cin, W*Cmid) / (3, W*Cmid, W*Cout)."""
    B, H, wcin = x_rows.shape
    KH, _, wcmid = w1_band.shape
    _, _, wcout = w2_band.shape

    kernel = functools.partial(_fused_double_conv_kernel, H=H)

    return pl.pallas_call(
        kernel,
        out_shape=jax.ShapeDtypeStruct((B, H, wcout), jnp.float32),
        grid_spec=pltpu.PrefetchScalarGridSpec(
            num_scalar_prefetch=0,
            grid=(B,),
            in_specs=[
                pl.BlockSpec((1, H, wcin), lambda b: (b, 0, 0)),
                pl.BlockSpec((KH, wcin, wcmid), lambda b: (0, 0, 0)),
                pl.BlockSpec((KH, wcmid, wcout), lambda b: (0, 0, 0)),
            ],
            out_specs=pl.BlockSpec((1, H, wcout), lambda b: (b, 0, 0)),
            scratch_shapes=[
                pltpu.VMEM((H + 2, wcin), jnp.float32),
                pltpu.VMEM((H + 2, wcmid), jnp.float32),
            ],
        ),
        compiler_params=pltpu.CompilerParams(
            dimension_semantics=("parallel",),
            vmem_limit_bytes=32 * 1024 * 1024,
        ),
    )(x_rows, w1_band, w2_band)


@jax.jit
def conv_module_forward(x_nchw, w1_oihw, w2_oihw):
    """Equivalent of TSNet.conv.forward: (B, Cin, H, W) -> (B, H*W, Cout)."""
    B, Cin, H, W = x_nchw.shape
    Cout = w2_oihw.shape[0]

    # NCHW -> NHWC -> rows of width W*Cin (free reshape after the transpose).
    x_rows = jnp.transpose(x_nchw, (0, 2, 3, 1)).reshape(B, H, W * Cin)

    w1_band = _band_weights(w1_oihw, W)      # (3, W*Cin,  W*Cmid)
    w2_band = _band_weights(w2_oihw, W)      # (3, W*Cmid, W*Cout)

    out_rows = _fused_double_conv(x_rows, w1_band, w2_band)   # (B, H, W*Cout)

    # NCHW flatten(2).transpose(1,2) == channels-last reshape (free).
    return out_rows.reshape(B, H * W, Cout)


# ---------------------------------------------------------------------------
# Pure-JAX reference (lax conv) for correctness checking.
# ---------------------------------------------------------------------------
def _reference(x_nchw, w1_oihw, w2_oihw):
    dn = ("NCHW", "OIHW", "NCHW")
    h = lax.conv_general_dilated(x_nchw, w1_oihw, (1, 1), "SAME",
                                 dimension_numbers=dn,
                                 precision=lax.Precision.HIGHEST)
    h = jnp.maximum(h, 0.0)
    h = lax.conv_general_dilated(h, w2_oihw, (1, 1), "SAME",
                                 dimension_numbers=dn,
                                 precision=lax.Precision.HIGHEST)
    h = jnp.maximum(h, 0.0)
    B, C, H, W = h.shape
    return jnp.transpose(h.reshape(B, C, H * W), (0, 2, 1))


if __name__ == "__main__":
    # Small shapes consistent with the module (input_dim -> embed_dim, 3x3 convs).
    B, Cin, H, W = 2, 4, 16, 16
    Cout = 8  # embed_dim

    key = jax.random.PRNGKey(0)
    kx, k1, k2 = jax.random.split(key, 3)

    x = jax.random.normal(kx, (B, Cin, H, W), dtype=jnp.float32)
    fan_in1 = Cin * 3 * 3
    fan_in2 = Cout * 3 * 3
    w1 = jax.random.uniform(k1, (Cout, Cin, 3, 3), jnp.float32,
                            -1.0 / jnp.sqrt(fan_in1), 1.0 / jnp.sqrt(fan_in1))
    w2 = jax.random.uniform(k2, (Cout, Cout, 3, 3), jnp.float32,
                            -1.0 / jnp.sqrt(fan_in2), 1.0 / jnp.sqrt(fan_in2))

    out = jax.block_until_ready(conv_module_forward(x, w1, w2))
    ref = jax.block_until_ready(_reference(x, w1, w2))

    assert out.shape == (B, H * W, Cout), out.shape
    max_err = float(jnp.max(jnp.abs(out - ref)))
    assert jnp.allclose(out, ref, atol=1e-4, rtol=1e-4), max_err

    print("KERNEL_OK")
</pallas_src>

<mosaic_0001>
module attributes {stable_mosaic.version = 11 : i64} {
  func.func @_fused_double_conv_kernel(%arg0: i32, %arg1: memref<1x16x64xf32, #tpu.memory_space<vmem>>, %arg2: memref<3x64x128xf32, #tpu.memory_space<vmem>>, %arg3: memref<3x128x128xf32, #tpu.memory_space<vmem>>, %arg4: memref<1x16x128xf32, #tpu.memory_space<vmem>>, %arg5: memref<18x64xf32, #tpu.memory_space<vmem>>, %arg6: memref<18x128xf32, #tpu.memory_space<vmem>>) attributes {dimension_semantics = [#tpu.dimension_semantics<parallel>], iteration_bounds = array<i64: 2>, scalar_prefetch = 0 : i64, scratch_operands = 2 : i64, tpu.core_type = #tpu.core_type<tc>, window_params = [{transform_indices = @transform_0, window_bounds = array<i64: 1, 16, 64>}, {pipeline_mode = #tpu.pipeline_mode<synchronous>, transform_indices = @transform_1, window_bounds = array<i64: 3, 64, 128>}, {pipeline_mode = #tpu.pipeline_mode<synchronous>, transform_indices = @transform_2, window_bounds = array<i64: 3, 128, 128>}, {transform_indices = @transform_3, window_bounds = array<i64: 1, 16, 128>}]} {
    %cst = arith.constant 0.000000e+00 : f32
    %0 = vector.broadcast %cst : f32 to vector<1x64xf32>
    %c0 = arith.constant 0 : index
    %c0_0 = arith.constant 0 : index
    %1 = vector.load %arg5[%c0, %c0_0] : memref<18x64xf32, #tpu.memory_space<vmem>>, vector<1x64xf32>
    tpu.vector_store %arg5[%c0, %c0_0], %0 {strides = array<i32>} : memref<18x64xf32, #tpu.memory_space<vmem>>, vector<1x64xf32>,
    %c17 = arith.constant 17 : index
    %c0_1 = arith.constant 0 : index
    %2 = vector.load %arg5[%c17, %c0_1] : memref<18x64xf32, #tpu.memory_space<vmem>>, vector<1x64xf32>
    tpu.vector_store %arg5[%c17, %c0_1], %0 {strides = array<i32>} : memref<18x64xf32, #tpu.memory_space<vmem>>, vector<1x64xf32>,
    %c0_2 = arith.constant 0 : index
    %c0_3 = arith.constant 0 : index
    %c0_4 = arith.constant 0 : index
    %3 = vector.load %arg1[%c0_2, %c0_3, %c0_4] : memref<1x16x64xf32, #tpu.memory_space<vmem>>, vector<1x16x64xf32>
    %4 = vector.shape_cast %3 : vector<1x16x64xf32> to vector<16x64xf32>
    %c1 = arith.constant 1 : index
    %c0_5 = arith.constant 0 : index
    %5 = vector.load %arg5[%c1, %c0_5] : memref<18x64xf32, #tpu.memory_space<vmem>>, vector<16x64xf32>
    tpu.vector_store %arg5[%c1, %c0_5], %4 {strides = array<i32>} : memref<18x64xf32, #tpu.memory_space<vmem>>, vector<16x64xf32>,
    %c0_6 = arith.constant 0 : index
    %c0_7 = arith.constant 0 : index
    %6 = vector.load %arg5[%c0_6, %c0_7] : memref<18x64xf32, #tpu.memory_space<vmem>>, vector<16x64xf32>
    %c0_8 = arith.constant 0 : index
    %c0_9 = arith.constant 0 : index
    %c0_10 = arith.constant 0 : index
    %7 = vector.load %arg2[%c0_8, %c0_9, %c0_10] : memref<3x64x128xf32, #tpu.memory_space<vmem>>, vector<1x64x128xf32>
    %8 = vector.shape_cast %7 : vector<1x64x128xf32> to vector<64x128xf32>
    %cst_11 = arith.constant dense<0.000000e+00> : vector<16x128xf32>
    %9 = tpu.matmul %6, %8, %cst_11 {dimension_numbers = #tpu.dot_dimension_numbers<[1], [0], [0], [1], [0, 0, 1, 1], [], []>} : vector<16x64xf32>, vector<64x128xf32>, vector<16x128xf32> -> vector<16x128xf32>
    %c1_12 = arith.constant 1 : index
    %c0_13 = arith.constant 0 : index
    %10 = vector.load %arg5[%c1_12, %c0_13] : memref<18x64xf32, #tpu.memory_space<vmem>>, vector<16x64xf32>
    %c1_14 = arith.constant 1 : index
    %c0_15 = arith.constant 0 : index
    %c0_16 = arith.constant 0 : index
    %11 = vector.load %arg2[%c1_14, %c0_15, %c0_16] : memref<3x64x128xf32, #tpu.memory_space<vmem>>, vector<1x64x128xf32>
    %12 = vector.shape_cast %11 : vector<1x64x128xf32> to vector<64x128xf32>
    %cst_17 = arith.constant dense<0.000000e+00> : vector<16x128xf32>
    %13 = tpu.matmul %10, %12, %cst_17 {dimension_numbers = #tpu.dot_dimension_numbers<[1], [0], [0], [1], [0, 0, 1, 1], [], []>} : vector<16x64xf32>, vector<64x128xf32>, vector<16x128xf32> -> vector<16x128xf32>
    %14 = arith.addf %9, %13 : vector<16x128xf32>
    %c2 = arith.constant 2 : index
    %c0_18 = arith.constant 0 : index
    %15 = vector.load %arg5[%c2, %c0_18] : memref<18x64xf32, #tpu.memory_space<vmem>>, vector<16x64xf32>
    %c2_19 = arith.constant 2 : index
    %c0_20 = arith.constant 0 : index
    %c0_21 = arith.constant 0 : index
    %16 = vector.load %arg2[%c2_19, %c0_20, %c0_21] : memref<3x64x128xf32, #tpu.memory_space<vmem>>, vector<1x64x128xf32>
    %17 = vector.shape_cast %16 : vector<1x64x128xf32> to vector<64x128xf32>
    %cst_22 = arith.constant dense<0.000000e+00> : vector<16x128xf32>
    %18 = tpu.matmul %15, %17, %cst_22 {dimension_numbers = #tpu.dot_dimension_numbers<[1], [0], [0], [1], [0, 0, 1, 1], [], []>} : vector<16x64xf32>, vector<64x128xf32>, vector<16x128xf32> -> vector<16x128xf32>
    %19 = arith.addf %14, %18 : vector<16x128xf32>
    %cst_23 = arith.constant 0.000000e+00 : f32
    %20 = vector.broadcast %cst_23 : f32 to vector<16x128xf32>
    %21 = arith.maximumf %19, %20 : vector<16x128xf32>
    %cst_24 = arith.constant 0.000000e+00 : f32
    %22 = vector.broadcast %cst_24 : f32 to vector<1x128xf32>
    %c0_25 = arith.constant 0 : index
    %c0_26 = arith.constant 0 : index
    %23 = vector.load %arg6[%c0_25, %c0_26] : memref<18x128xf32, #tpu.memory_space<vmem>>, vector<1x128xf32>
    tpu.vector_store %arg6[%c0_25, %c0_26], %22 {strides = array<i32>} : memref<18x128xf32, #tpu.memory_space<vmem>>, vector<1x128xf32>,
    %c17_27 = arith.constant 17 : index
    %c0_28 = arith.constant 0 : index
    %24 = vector.load %arg6[%c17_27, %c0_28] : memref<18x128xf32, #tpu.memory_space<vmem>>, vector<1x128xf32>
    tpu.vector_store %arg6[%c17_27, %c0_28], %22 {strides = array<i32>} : memref<18x128xf32, #tpu.memory_space<vmem>>, vector<1x128xf32>,
    %c1_29 = arith.constant 1 : index
    %c0_30 = arith.constant 0 : index
    %25 = vector.load %arg6[%c1_29, %c0_30] : memref<18x128xf32, #tpu.memory_space<vmem>>, vector<16x128xf32>
    tpu.vector_store %arg6[%c1_29, %c0_30], %21 {strides = array<i32>} : memref<18x128xf32, #tpu.memory_space<vmem>>, vector<16x128xf32>,
    %c0_31 = arith.constant 0 : index
    %c0_32 = arith.constant 0 : index
    %26 = vector.load %arg6[%c0_31, %c0_32] : memref<18x128xf32, #tpu.memory_space<vmem>>, vector<16x128xf32>
    %c0_33 = arith.constant 0 : index
    %c0_34 = arith.constant 0 : index
    %c0_35 = arith.constant 0 : index
    %27 = vector.load %arg3[%c0_33, %c0_34, %c0_35] : memref<3x128x128xf32, #tpu.memory_space<vmem>>, vector<1x128x128xf32>
    %28 = vector.shape_cast %27 : vector<1x128x128xf32> to vector<128x128xf32>
    %cst_36 = arith.constant dense<0.000000e+00> : vector<16x128xf32>
    %29 = tpu.matmul %26, %28, %cst_36 {dimension_numbers = #tpu.dot_dimension_numbers<[1], [0], [0], [1], [0, 0, 1, 1], [], []>} : vector<16x128xf32>, vector<128x128xf32>, vector<16x128xf32> -> vector<16x128xf32>
    %c1_37 = arith.constant 1 : index
    %c0_38 = arith.constant 0 : index
    %30 = vector.load %arg6[%c1_37, %c0_38] : memref<18x128xf32, #tpu.memory_space<vmem>>, vector<16x128xf32>
    %c1_39 = arith.constant 1 : index
    %c0_40 = arith.constant 0 : index
    %c0_41 = arith.constant 0 : index
    %31 = vector.load %arg3[%c1_39, %c0_40, %c0_41] : memref<3x128x128xf32, #tpu.memory_space<vmem>>, vector<1x128x128xf32>
    %32 = vector.shape_cast %31 : vector<1x128x128xf32> to vector<128x128xf32>
    %cst_42 = arith.constant dense<0.000000e+00> : vector<16x128xf32>
    %33 = tpu.matmul %30, %32, %cst_42 {dimension_numbers = #tpu.dot_dimension_numbers<[1], [0], [0], [1], [0, 0, 1, 1], [], []>} : vector<16x128xf32>, vector<128x128xf32>, vector<16x128xf32> -> vector<16x128xf32>
    %34 = arith.addf %29, %33 : vector<16x128xf32>
    %c2_43 = arith.constant 2 : index
    %c0_44 = arith.constant 0 : index
    %35 = vector.load %arg6[%c2_43, %c0_44] : memref<18x128xf32, #tpu.memory_space<vmem>>, vector<16x128xf32>
    %c2_45 = arith.constant 2 : index
    %c0_46 = arith.constant 0 : index
    %c0_47 = arith.constant 0 : index
    %36 = vector.load %arg3[%c2_45, %c0_46, %c0_47] : memref<3x128x128xf32, #tpu.memory_space<vmem>>, vector<1x128x128xf32>
    %37 = vector.shape_cast %36 : vector<1x128x128xf32> to vector<128x128xf32>
    %cst_48 = arith.constant dense<0.000000e+00> : vector<16x128xf32>
    %38 = tpu.matmul %35, %37, %cst_48 {dimension_numbers = #tpu.dot_dimension_numbers<[1], [0], [0], [1], [0, 0, 1, 1], [], []>} : vector<16x128xf32>, vector<128x128xf32>, vector<16x128xf32> -> vector<16x128xf32>
    %39 = arith.addf %34, %38 : vector<16x128xf32>
    %cst_49 = arith.constant 0.000000e+00 : f32
    %40 = vector.broadcast %cst_49 : f32 to vector<16x128xf32>
    %41 = arith.maximumf %39, %40 : vector<16x128xf32>
    %c0_50 = arith.constant 0 : index
    %c0_51 = arith.constant 0 : index
    %c0_52 = arith.constant 0 : index
    %42 = vector.load %arg4[%c0_50, %c0_51, %c0_52] : memref<1x16x128xf32, #tpu.memory_space<vmem>>, vector<1x16x128xf32>
    %43 = vector.shape_cast %42 : vector<1x16x128xf32> to vector<16x128xf32>
    %44 = vector.shape_cast %41 : vector<16x128xf32> to vector<1x16x128xf32>
    tpu.vector_store %arg4[%c0_50, %c0_51, %c0_52], %44 {strides = array<i32>} : memref<1x16x128xf32, #tpu.memory_space<vmem>>, vector<1x16x128xf32>,
    return
  }
  func.func @transform_0(%arg0: i32) -> (i32, i32, i32) {
    %c0_i32 = arith.constant 0 : i32
    %c0_i32_0 = arith.constant 0 : i32
    %c0_i32_1 = arith.constant 0 : i32
    return %arg0, %c0_i32, %c0_i32_0 : i32, i32, i32
  }
  func.func @transform_1(%arg0: i32) -> (i32, i32, i32) {
    %c0_i32 = arith.constant 0 : i32
    %c0_i32_0 = arith.constant 0 : i32
    %c0_i32_1 = arith.constant 0 : i32
    %c0_i32_2 = arith.constant 0 : i32
    return %c0_i32, %c0_i32_0, %c0_i32_1 : i32, i32, i32
  }
  func.func @transform_2(%arg0: i32) -> (i32, i32, i32) {
    %c0_i32 = arith.constant 0 : i32
    %c0_i32_0 = arith.constant 0 : i32
    %c0_i32_1 = arith.constant 0 : i32
    %c0_i32_2 = arith.constant 0 : i32
    return %c0_i32, %c0_i32_0, %c0_i32_1 : i32, i32, i32
  }
  func.func @transform_3(%arg0: i32) -> (i32, i32, i32) {
    %c0_i32 = arith.constant 0 : i32
    %c0_i32_0 = arith.constant 0 : i32
    %c0_i32_1 = arith.constant 0 : i32
    return %arg0, %c0_i32, %c0_i32_0 : i32, i32, i32
  }
}

</mosaic_0001>

<llo_original>
// kernel: squeeze.6
$region0: #{squeeze.6}
  %s0 = inlined_call_operand.vmem [shape: f32[1,3,4,8], index: 0, kind: input, shape index: {}]
  %s1 = inlined_call_operand.vmem [shape: f32[12,8], index: 1, kind: output, shape index: {}]
  $region1: #{squeeze.6} parent=0
    #allocation0 [shape = 'u8[12288]{0}', space=vmem, size = 0x3000, scoped, tag = 'scoped mem for input reshape']
    %s3 = ssub.s32 16, 1
    %s4 = scalar_lea.vmem %s0, 8
    %v5 = vld [vmem:[%s4] sm:%s3]
    %s6 = scalar_lea.vmem [#allocation0], 16
    %7 = vst [vmem:[%s6] sm:%s3] %v5
    %s8 = scalar_lea.vmem %s0, 4
    %v9 = vld [vmem:[%s8] sm:%s3]
    %s10 = scalar_lea.vmem [#allocation0], 8
    %11 = vst [vmem:[%s10] sm:%s3] %v9
    %v12 = vld [vmem:[%s0] sm:%s3]
    %13 = vst [vmem:[#allocation0] sm:%s3] %v12
    %v14 = vld [vmem:[#allocation0] sm:$0xf]
    %vm15 = vcmask 64512
    %16 = vst.msk [vmem:[%s1] sm:$0xf] %vm15, %v14
    %s17 = scalar_lea.vmem [#allocation0], 8
    %v18 = vld [vmem:[%s17] sm:$0xf]
    %vm19 = vcmask 64512
    %s20 = scalar_lea.vmem %s1, 4
    %21 = vst.msk [vmem:[%s20] sm:$0xf] %vm19, %v18
    %s22 = scalar_lea.vmem [#allocation0], 16
    %v23 = vld [vmem:[%s22] sm:$0xf]
    %vm24 = vcmask 64512
    %s25 = scalar_lea.vmem %s1, 8
    %26 = vst.msk [vmem:[%s25] sm:$0xf] %vm24, %v23

// kernel: conv_module_forward.1
$region0: #{conv_module_forward.1}
  #allocation0 [shape = 'u32[]', space=smem, size = 0x4, offset = 0x4, fixed_abs, tag = 'smem constant byte address 0x4 - core index']
  #allocation1 [shape = 'u32[72,128]{1,0:T(1,128)}', space=vmem, size = 0x9000, scoped, tag = 'internal scratch']
  #allocation2 [shape = 'f32[18,64]{1,0:T(8,128)}', space=vmem, size = 0x3000, scoped, tag = 'scratch operand']
  #allocation3 [shape = 'f32[18,128]{1,0:T(8,128)}', space=vmem, size = 0x3000, scoped, tag = 'scratch operand']
  %s0 = inlined_call_operand.vmem [shape: f32[2,16,64], index: 0, kind: input, shape index: {}]
  %s1 = inlined_call_operand.vmem [shape: f32[3,64,128], index: 1, kind: input, shape index: {}]
  %s2 = inlined_call_operand.vmem [shape: f32[3,128,128], index: 2, kind: input, shape index: {}]
  %s3 = inlined_call_operand.vmem [shape: f32[2,16,128], index: 3, kind: output, shape index: {}]
  %s4 = sld [smem:[#allocation0]]
  $region45: #{conv_module_forward.1} parent=0
    _
  %s6 = ssub.s32 1, %s4
  %s7 = scalar_select 0, %s6, %s4
  loop: start=0, step=1, limit=4
  $region2: #{conv_module_forward.1} parent=0 // loop_pre_header
    _
  $region3: #{conv_module_forward.1} parent=0 // loop_header
    %s9 = sphi 0, %s13
    %p10 = scmp.ge.s32.totalorder %s9, 4
    %s19 = sphi 0, %s21
    %s22 = sphi 0, %s19
    %s23 = sphi 0, %s22
    %s39 = sphi 0, %s23
    %s43 = sphi 0, %s43
    %s45 = sphi 0, %s43
    %s46 = sphi 0, %s45
    %s60 = sphi 0, %s46
    %s64 = sphi 0, %s64
    %s66 = sphi 0, %s64
    %s67 = sphi 0, %s66
    %s81 = sphi 0, %s67
    %s87 = sphi 0, %s89
    %s90 = sphi 0, %s87
    %s91 = sphi 0, %s90
    %s107 = sphi 0, %s91
  $region4: #{conv_module_forward.1} parent=0 // loop_header_branch
    %12 = sbr.rel (%p10) target = $region8
  $region5: #{conv_module_forward.1} parent=0 // loop_body
    %s14 = ssub.s32 %s9, 1
    %s15 = ssub.s32 %s9, 2
    %s16 = sadd.s32 %s9, 1
    %s17 = ssub.s32 %s9, %s16
    %p18 = scmp.eq.s32.totalorder %s17, 0
    %s20 = sadd.s32 %s19, 1
    %s21 = scalar_select %p18, %s19, %s20
    %p24 = pneg %p18
    %p25 = scmp.eq.s32.totalorder %s9, 1
    %p26 = por %p24, %p25
    %p27 = scmp.ne.s32.totalorder %s19, %s22
    %p28 = scmp.eq.s32.totalorder %s9, 0
    %p29 = por %p27, %p28
    %p30 = scmp.ne.s32.totalorder %s19, %s22
    %p31 = scmp.eq.s32.totalorder %s14, 1
    %p32 = por %p30, %p31
    %p33 = scmp.ne.s32.totalorder %s22, %s23
    %p34 = scmp.eq.s32.totalorder %s14, 0
    %p35 = por %p33, %p34
    %p36 = scmp.ne.s32.totalorder %s22, %s23
    %p37 = scmp.eq.s32.totalorder %s15, 1
    %p38 = por %p36, %p37
    %p40 = scmp.ne.s32.totalorder %s23, %s39
    %p41 = scmp.eq.s32.totalorder %s15, 0
    %p42 = por %p40, %p41
    %s44 = sadd.s32 %s43, 1
    %p47 = scmp.eq.s32.totalorder %s9, 1
    %p48 = scmp.ne.s32.totalorder %s43, %s45
    %p49 = scmp.eq.s32.totalorder %s9, 0
    %p50 = por %p48, %p49
    %p51 = scmp.ne.s32.totalorder %s43, %s45
    %p52 = scmp.eq.s32.totalorder %s14, 1
    %p53 = por %p51, %p52
    %p54 = scmp.ne.s32.totalorder %s45, %s46
    %p55 = scmp.eq.s32.totalorder %s14, 0
    %p56 = por %p54, %p55
    %p57 = scmp.ne.s32.totalorder %s45, %s46
    %p58 = scmp.eq.s32.totalorder %s15, 1
    %p59 = por %p57, %p58
    %p61 = scmp.ne.s32.totalorder %s46, %s60
    %p62 = scmp.eq.s32.totalorder %s15, 0
    %p63 = por %p61, %p62
    %s65 = sadd.s32 %s64, 1
    %p68 = scmp.eq.s32.totalorder %s9, 1
    %p69 = scmp.ne.s32.totalorder %s64, %s66
    %p70 = scmp.eq.s32.totalorder %s9, 0
    %p71 = por %p69, %p70
    %p72 = scmp.ne.s32.totalorder %s64, %s66
    %p73 = scmp.eq.s32.totalorder %s14, 1
    %p74 = por %p72, %p73
    %p75 = scmp.ne.s32.totalorder %s66, %s67
    %p76 = scmp.eq.s32.totalorder %s14, 0
    %p77 = por %p75, %p76
    %p78 = scmp.ne.s32.totalorder %s66, %s67
    %p79 = scmp.eq.s32.totalorder %s15, 1
    %p80 = por %p78, %p79
    %p82 = scmp.ne.s32.totalorder %s67, %s81
    %p83 = scmp.eq.s32.totalorder %s15, 0
    %p84 = por %p82, %p83
    %s85 = ssub.s32 %s9, %s16
    %p86 = scmp.eq.s32.totalorder %s85, 0
    %s88 = sadd.s32 %s87, 1
    %s89 = scalar_select %p86, %s87, %s88
    %p92 = pneg %p86
    %p93 = scmp.eq.s32.totalorder %s9, 1
    %p94 = por %p92, %p93
    %p95 = scmp.ne.s32.totalorder %s87, %s90
    %p96 = scmp.eq.s32.totalorder %s9, 0
    %p97 = por %p95, %p96
    %p98 = scmp.ne.s32.totalorder %s87, %s90
    %p99 = scmp.eq.s32.totalorder %s14, 1
    %p100 = por %p98, %p99
    %p101 = scmp.ne.s32.totalorder %s90, %s91
    %p102 = scmp.eq.s32.totalorder %s14, 0
    %p103 = por %p101, %p102
    %p104 = scmp.ne.s32.totalorder %s90, %s91
    %p105 = scmp.eq.s32.totalorder %s15, 1
    %p106 = por %p104, %p105
    %p108 = scmp.ne.s32.totalorder %s91, %s107
    %p109 = scmp.eq.s32.totalorder %s15, 0
    %p110 = por %p108, %p109
    %p111 = scmp.le.s32.totalorder 1, %s9
    %p112 = scmp.lt.s32.totalorder %s9, 3
    %p113 = pnand %p111, %p112
    %p114 = pneg %p113
    // Predicated region
    $region9: #{conv_module_forward.1} parent=5 // pred_check
      _
    $region10: #{conv_module_forward.1} parent=5 // pred_check_branch
      %116 = sbr.rel (%p113) target = $region12
    $region11: #{conv_module_forward.1} parent=5 // pred_region
      %s117 = ssub.s32 %s9, 1
      // Predicated region
      $region13: #{conv_module_forward.1} parent=11 // pred_check
        %p118 = pneg %p56
      $region14: #{conv_module_forward.1} parent=11 // pred_check_branch
        %120 = sbr.rel (%p118) target = $region16
      $region15: #{conv_module_forward.1} parent=11 // pred_region
        _
      $region16: #{conv_module_forward.1} parent=11 // pred_fallthru
        _
      // Predicated region
      $region17: #{conv_module_forward.1} parent=11 // pred_check
        %p121 = pneg %p77
      $region18: #{conv_module_forward.1} parent=11 // pred_check_branch
        %123 = sbr.rel (%p121) target = $region20
      $region19: #{conv_module_forward.1} parent=11 // pred_region
        _
      $region20: #{conv_module_forward.1} parent=11 // pred_fallthru
        _
    $region12: #{conv_module_forward.1} parent=5 // pred_fallthru
      _
    %p124 = scmp.lt.s32.totalorder %s9, 2
    // Predicated region
    $region21: #{conv_module_forward.1} parent=5 // pred_check
      %p125 = pneg %p124
    $region22: #{conv_module_forward.1} parent=5 // pred_check_branch
      %127 = sbr.rel (%p125) target = $region24
    $region23: #{conv_module_forward.1} parent=5 // pred_region
      // Predicated region
      $region25: #{conv_module_forward.1} parent=23 // pred_check
        %p128 = pneg %p29
      $region26: #{conv_module_forward.1} parent=23 // pred_check_branch
        %130 = sbr.rel (%p128) target = $region28
      $region27: #{conv_module_forward.1} parent=23 // pred_region
        %p131 = scmp.lt.s32.totalorder %s9, 1
        %s132 = scalar_select %p131, %s9, 1
        %s133 = smul.addr %s132, 2
        %s134 = smul.addr %s133, 8
        %s135 = scalar_lea.vmem %s0, %s134
      $region28: #{conv_module_forward.1} parent=23 // pred_fallthru
        _
    $region24: #{conv_module_forward.1} parent=5 // pred_fallthru
      _
    %p136 = scmp.le.s32.totalorder 1, %s9
    %p137 = scmp.lt.s32.totalorder %s9, 3
    %p138 = pnand %p136, %p137
    %p139 = pneg %p138
    // Predicated region
    $region29: #{conv_module_forward.1} parent=5 // pred_check
      _
    $region30: #{conv_module_forward.1} parent=5 // pred_check_branch
      %141 = sbr.rel (%p138) target = $region32
    $region31: #{conv_module_forward.1} parent=5 // pred_region
      %s142 = ssub.s32 %s9, 1
      %p143 = scmp.lt.s32.totalorder %s14, 1
      %s144 = scalar_select %p143, %s14, 1
      %s145 = smul.addr %s144, 2
      %s146 = smul.addr %s145, 8
      %s147 = scalar_lea.vmem %s0, %s146
      %p148 = pneg %p35
      %p149 = pneg %p32
      %p150 = pneg %p56
      %p151 = pneg %p53
      %p152 = pneg %p77
      %p153 = pneg %p74
      %p154 = pneg %p103
      %p155 = pneg %p100
      %p156 = scmp.lt.s32.totalorder %s14, 1
      %s157 = scalar_select %p156, %s14, 1
      %s158 = smul.addr %s157, 2
      %s159 = smul.addr %s158, 8
      %s160 = scalar_lea.vmem %s3, %s159
      %p161 = scmp.lt.s32.totalorder %s14, 1
      %s162 = scalar_select %p161, %s14, 1
      %s163 = smul.addr %s162, 2
      %s164 = smul.addr %s163, 8
      %s165 = scalar_lea.vmem %s0, %s164
      %p166 = scmp.lt.s32.totalorder %s14, 1
      %s167 = scalar_select %p166, %s14, 1
      %s168 = smul.addr %s167, 2
      %s169 = smul.addr %s168, 8
      %s170 = scalar_lea.vmem %s3, %s169
      %vm171 = vcmask 516096
      %172 = vst.msk [vmem:[#allocation2] sm:$0x1] %vm171, 0.0
      %173 = vst.msk [vmem:[#allocation2 + $0x11] sm:$0x1] %vm171, 0.0
      %v174 = vld [vmem:[%s165] sm:$0xff]
      %v175 = vld [vmem:[%s165 + $0x8] sm:$0xff]
      %vm176 = vcmask 523264
      %177 = vst.msk [vmem:[#allocation2 + $0x1] sm:$0xff] %vm176, %v174
      %178 = vst.msk [vmem:[#allocation2 + $0x9] sm:$0xff] %vm176, %v175
      %v179 = vld [vmem:[#allocation2] sm:$0xff]
      %v180 = vld [vmem:[#allocation2 + $0x8] sm:$0xff]
      %v181 = vld [vmem:[%s1] sm:$0xff]
      %v182 = vld [vmem:[%s1 + $0x8] sm:$0xff]
      %v183 = vld [vmem:[%s1 + $0x10] sm:$0xff]
      %v184 = vld [vmem:[%s1 + $0x18] sm:$0xff]
      %v185 = vld [vmem:[%s1 + $0x20] sm:$0xff]
      %v186 = vld [vmem:[%s1 + $0x28] sm:$0xff]
      %v187 = vld [vmem:[%s1 + $0x30] sm:$0xff]
      %v188 = vld [vmem:[%s1 + $0x38] sm:$0xff]
      %v189 = vld [vmem:[#allocation2 + $0x1] sm:$0xff]
      %v190 = vld [vmem:[#allocation2 + $0x9] sm:$0xff]
      %s191 = scalar_lea.vmem %s1, 64
      %v192 = vld [vmem:[%s191] sm:$0xff]
      %v193 = vld [vmem:[%s191 + $0x8] sm:$0xff]
      %v194 = vld [vmem:[%s191 + $0x10] sm:$0xff]
      %v195 = vld [vmem:[%s191 + $0x18] sm:$0xff]
      %v196 = vld [vmem:[%s191 + $0x20] sm:$0xff]
      %v197 = vld [vmem:[%s191 + $0x28] sm:$0xff]
      %v198 = vld [vmem:[%s191 + $0x30] sm:$0xff]
      %v199 = vld [vmem:[%s191 + $0x38] sm:$0xff]
      %v201 = vsel %vm176, %v189, 0
      %v204 = vsel %vm176, %v190, 0
      %206 = vmatpush.msra.mxu0 0.0
      %207 = vmatpush.msra.mxu0 0.0
      %208 = vmatpush.msra.mxu0 0.0
      %209 = vmatpush.msra.mxu0 0.0
      %210 = vmatpush.msra.mxu0 0.0
      %211 = vmatpush.msra.mxu0 0.0
      %212 = vmatpush.msra.mxu0 0.0
      %213 = vmatpush.msra.mxu0 0.0
      %214 = vmatpush.msra.mxu0 %v199
      %215 = vmatpush.msra.mxu0 %v198
      %216 = vmatpush.msra.mxu0 %v197
      %217 = vmatpush.msra.mxu0 %v196
      %218 = vmatpush.msra.mxu0 %v195
      %219 = vmatpush.msra.mxu0 %v194
      %220 = vmatpush.msra.mxu0 %v193
      %221 = vmatpush.msra.mxu0 %v192
      %222 = vmatmul.f32.gmra.mxu0 %v201
      %v223 = vpop.f32.mrf.mxu0
      %v224 = vadd.f32 0.0, %v223
      %225 = vmatmul.f32.gmra.mxu0 %v204
      %v226 = vpop.f32.mrf.mxu0
      %v227 = vadd.f32 0.0, %v226
      %228 = vdwg.mxu0
      %v230 = vsel %vm176, %v179, 0
      %v233 = vsel %vm176, %v180, 0
      %235 = vmatpush.msra.mxu0 0.0
      %236 = vmatpush.msra.mxu0 0.0
      %237 = vmatpush.msra.mxu0 0.0
      %238 = vmatpush.msra.mxu0 0.0
      %239 = vmatpush.msra.mxu0 0.0
      %240 = vmatpush.msra.mxu0 0.0
      %241 = vmatpush.msra.mxu0 0.0
      %242 = vmatpush.msra.mxu0 0.0
      %243 = vmatpush.msra.mxu0 %v188
      %244 = vmatpush.msra.mxu0 %v187
      %245 = vmatpush.msra.mxu0 %v186
      %246 = vmatpush.msra.mxu0 %v185
      %247 = vmatpush.msra.mxu0 %v184
      %248 = vmatpush.msra.mxu0 %v183
      %249 = vmatpush.msra.mxu0 %v182
      %250 = vmatpush.msra.mxu0 %v181
      %251 = vmatmul.f32.gmra.mxu0 %v230
      %v252 = vpop.f32.mrf.mxu0
      %v253 = vadd.f32 %v224, %v252
      %254 = vmatmul.f32.gmra.mxu0 %v233
      %v255 = vpop.f32.mrf.mxu0
      %v256 = vadd.f32 %v227, %v255
      %257 = vdwg.mxu0
      %v258 = vld [vmem:[#allocation2 + $0x2] sm:$0xff]
      %v259 = vld [vmem:[#allocation2 + $0xa] sm:$0xff]
      %s260 = scalar_lea.vmem %s1, 128
      %v261 = vld [vmem:[%s260] sm:$0xff]
      %v262 = vld [vmem:[%s260 + $0x8] sm:$0xff]
      %v263 = vld [vmem:[%s260 + $0x10] sm:$0xff]
      %v264 = vld [vmem:[%s260 + $0x18] sm:$0xff]
      %v265 = vld [vmem:[%s260 + $0x20] sm:$0xff]
      %v266 = vld [vmem:[%s260 + $0x28] sm:$0xff]
      %v267 = vld [vmem:[%s260 + $0x30] sm:$0xff]
      %v268 = vld [vmem:[%s260 + $0x38] sm:$0xff]
      %v270 = vsel %vm176, %v258, 0
      %v273 = vsel %vm176, %v259, 0
      %275 = vmatpush.msra.mxu0 0.0
      %276 = vmatpush.msra.mxu0 0.0
      %277 = vmatpush.msra.mxu0 0.0
      %278 = vmatpush.msra.mxu0 0.0
      %279 = vmatpush.msra.mxu0 0.0
      %280 = vmatpush.msra.mxu0 0.0
      %281 = vmatpush.msra.mxu0 0.0
      %282 = vmatpush.msra.mxu0 0.0
      %283 = vmatpush.msra.mxu0 %v268
      %284 = vmatpush.msra.mxu0 %v267
      %285 = vmatpush.msra.mxu0 %v266
      %286 = vmatpush.msra.mxu0 %v265
      %287 = vmatpush.msra.mxu0 %v264
      %288 = vmatpush.msra.mxu0 %v263
      %289 = vmatpush.msra.mxu0 %v262
      %290 = vmatpush.msra.mxu0 %v261
      %291 = vmatmul.f32.gmra.mxu0 %v270
      %v292 = vpop.f32.mrf.mxu0
      %v293 = vadd.f32 0.0, %v292
      %294 = vmatmul.f32.gmra.mxu0 %v273
      %v295 = vpop.f32.mrf.mxu0
      %v296 = vadd.f32 0.0, %v295
      %297 = vdwg.mxu0
      %v298 = vadd.f32 %v253, %v293
      %v299 = vadd.f32 %v256, %v296
      %v300 = vmax.f32 %v298, 0.0
      %v301 = vmax.f32 %v299, 0.0
      %302 = vst [vmem:[#allocation3] sm:$0x1] 0.0
      %303 = vst [vmem:[#allocation3 + $0x11] sm:$0x1] 0.0
      %304 = vst [vmem:[#allocation3 + $0x1] sm:$0xff] %v300
      %305 = vst [vmem:[#allocation3 + $0x9] sm:$0xff] %v301
      %v306 = vld [vmem:[#allocation3] sm:$0xff]
      %v307 = vld [vmem:[#allocation3 + $0x8] sm:$0xff]
      %v308 = vld [vmem:[%s2] sm:$0xff]
      %v309 = vld [vmem:[%s2 + $0x8] sm:$0xff]
      %v310 = vld [vmem:[%s2 + $0x10] sm:$0xff]
      %v311 = vld [vmem:[%s2 + $0x18] sm:$0xff]
      %v312 = vld [vmem:[%s2 + $0x20] sm:$0xff]
      %v313 = vld [vmem:[%s2 + $0x28] sm:$0xff]
      %v314 = vld [vmem:[%s2 + $0x30] sm:$0xff]
      %v315 = vld [vmem:[%s2 + $0x38] sm:$0xff]
      %v316 = vld [vmem:[%s2 + $0x40] sm:$0xff]
      %v317 = vld [vmem:[%s2 + $0x48] sm:$0xff]
      %v318 = vld [vmem:[%s2 + $0x50] sm:$0xff]
      %v319 = vld [vmem:[%s2 + $0x58] sm:$0xff]
      %v320 = vld [vmem:[%s2 + $0x60] sm:$0xff]
      %v321 = vld [vmem:[%s2 + $0x68] sm:$0xff]
      %v322 = vld [vmem:[%s2 + $0x70] sm:$0xff]
      %v323 = vld [vmem:[%s2 + $0x78] sm:$0xff]
      %v324 = vld [vmem:[#allocation3 + $0x1] sm:$0xff]
      %v325 = vld [vmem:[#allocation3 + $0x9] sm:$0xff]
      %s326 = scalar_lea.vmem %s2, 128
      %v327 = vld [vmem:[%s326] sm:$0xff]
      %v328 = vld [vmem:[%s326 + $0x8] sm:$0xff]
      %v329 = vld [vmem:[%s326 + $0x10] sm:$0xff]
      %v330 = vld [vmem:[%s326 + $0x18] sm:$0xff]
      %v331 = vld [vmem:[%s326 + $0x20] sm:$0xff]
      %v332 = vld [vmem:[%s326 + $0x28] sm:$0xff]
      %v333 = vld [vmem:[%s326 + $0x30] sm:$0xff]
      %v334 = vld [vmem:[%s326 + $0x38] sm:$0xff]
      %v335 = vld [vmem:[%s326 + $0x40] sm:$0xff]
      %v336 = vld [vmem:[%s326 + $0x48] sm:$0xff]
      %v337 = vld [vmem:[%s326 + $0x50] sm:$0xff]
      %v338 = vld [vmem:[%s326 + $0x58] sm:$0xff]
      %v339 = vld [vmem:[%s326 + $0x60] sm:$0xff]
      %v340 = vld [vmem:[%s326 + $0x68] sm:$0xff]
      %v341 = vld [vmem:[%s326 + $0x70] sm:$0xff]
      %v342 = vld [vmem:[%s326 + $0x78] sm:$0xff]
      %343 = vmatpush.msra.mxu0 %v342
      %344 = vmatpush.msra.mxu0 %v341
      %345 = vmatpush.msra.mxu0 %v340
      %346 = vmatpush.msra.mxu0 %v339
      %347 = vmatpush.msra.mxu0 %v338
      %348 = vmatpush.msra.mxu0 %v337
      %349 = vmatpush.msra.mxu0 %v336
      %350 = vmatpush.msra.mxu0 %v335
      %351 = vmatpush.msra.mxu0 %v334
      %352 = vmatpush.msra.mxu0 %v333
      %353 = vmatpush.msra.mxu0 %v332
      %354 = vmatpush.msra.mxu0 %v331
      %355 = vmatpush.msra.mxu0 %v330
      %356 = vmatpush.msra.mxu0 %v329
      %357 = vmatpush.msra.mxu0 %v328
      %358 = vmatpush.msra.mxu0 %v327
      %359 = vmatmul.f32.gmra.mxu0 %v324
      %v360 = vpop.f32.mrf.mxu0
      %v361 = vadd.f32 0.0, %v360
      %362 = vmatmul.f32.gmra.mxu0 %v325
      %v363 = vpop.f32.mrf.mxu0
      %v364 = vadd.f32 0.0, %v363
      %365 = vdwg.mxu0
      %366 = vmatpush.msra.mxu0 %v323
      %367 = vmatpush.msra.mxu0 %v322
      %368 = vmatpush.msra.mxu0 %v321
      %369 = vmatpush.msra.mxu0 %v320
      %370 = vmatpush.msra.mxu0 %v319
      %371 = vmatpush.msra.mxu0 %v318
      %372 = vmatpush.msra.mxu0 %v317
      %373 = vmatpush.msra.mxu0 %v316
      %374 = vmatpush.msra.mxu0 %v315
      %375 = vmatpush.msra.mxu0 %v314
      %376 = vmatpush.msra.mxu0 %v313
      %377 = vmatpush.msra.mxu0 %v312
      %378 = vmatpush.msra.mxu0 %v311
      %379 = vmatpush.msra.mxu0 %v310
      %380 = vmatpush.msra.mxu0 %v309
      %381 = vmatpush.msra.mxu0 %v308
      %382 = vmatmul.f32.gmra.mxu0 %v306
      %v383 = vpop.f32.mrf.mxu0
      %v384 = vadd.f32 %v361, %v383
      %385 = vmatmul.f32.gmra.mxu0 %v307
      %v386 = vpop.f32.mrf.mxu0
      %v387 = vadd.f32 %v364, %v386
      %388 = vdwg.mxu0
      %v389 = vld [vmem:[#allocation3 + $0x2] sm:$0xff]
      %v390 = vld [vmem:[#allocation3 + $0xa] sm:$0xff]
      %s391 = scalar_lea.vmem %s2, 256
      %v392 = vld [vmem:[%s391] sm:$0xff]
      %v393 = vld [vmem:[%s391 + $0x8] sm:$0xff]
      %v394 = vld [vmem:[%s391 + $0x10] sm:$0xff]
      %v395 = vld [vmem:[%s391 + $0x18] sm:$0xff]
      %v396 = vld [vmem:[%s391 + $0x20] sm:$0xff]
      %v397 = vld [vmem:[%s391 + $0x28] sm:$0xff]
      %v398 = vld [vmem:[%s391 + $0x30] sm:$0xff]
      %v399 = vld [vmem:[%s391 + $0x38] sm:$0xff]
      %v400 = vld [vmem:[%s391 + $0x40] sm:$0xff]
      %v401 = vld [vmem:[%s391 + $0x48] sm:$0xff]
      %v402 = vld [vmem:[%s391 + $0x50] sm:$0xff]
      %v403 = vld [vmem:[%s391 + $0x58] sm:$0xff]
      %v404 = vld [vmem:[%s391 + $0x60] sm:$0xff]
      %v405 = vld [vmem:[%s391 + $0x68] sm:$0xff]
      %v406 = vld [vmem:[%s391 + $0x70] sm:$0xff]
      %v407 = vld [vmem:[%s391 + $0x78] sm:$0xff]
      %408 = vmatpush.msra.mxu0 %v407
      %409 = vmatpush.msra.mxu0 %v406
      %410 = vmatpush.msra.mxu0 %v405
      %411 = vmatpush.msra.mxu0 %v404
      %412 = vmatpush.msra.mxu0 %v403
      %413 = vmatpush.msra.mxu0 %v402
      %414 = vmatpush.msra.mxu0 %v401
      %415 = vmatpush.msra.mxu0 %v400
      %416 = vmatpush.msra.mxu0 %v399
      %417 = vmatpush.msra.mxu0 %v398
      %418 = vmatpush.msra.mxu0 %v397
      %419 = vmatpush.msra.mxu0 %v396
      %420 = vmatpush.msra.mxu0 %v395
      %421 = vmatpush.msra.mxu0 %v394
      %422 = vmatpush.msra.mxu0 %v393
      %423 = vmatpush.msra.mxu0 %v392
      %424 = vmatmul.f32.gmra.mxu0 %v389
      %v425 = vpop.f32.mrf.mxu0
      %v426 = vadd.f32 0.0, %v425
      %427 = vmatmul.f32.gmra.mxu0 %v390
      %v428 = vpop.f32.mrf.mxu0
      %v429 = vadd.f32 0.0, %v428
      %430 = vdwg.mxu0
      %v431 = vadd.f32 %v384, %v426
      %v432 = vadd.f32 %v387, %v429
      %v433 = vmax.f32 %v431, 0.0
      %v434 = vmax.f32 %v432, 0.0
      %435 = vst [vmem:[%s170] sm:$0xff] %v433
      %436 = vst [vmem:[%s170 + $0x8] sm:$0xff] %v434
      %p437 = scmp.lt.s32.totalorder %s14, 1
      %s438 = scalar_select %p437, %s14, 1
      %s439 = smul.addr %s438, 2
      %s440 = smul.addr %s439, 8
      %s441 = scalar_lea.vmem %s3, %s440
      // Predicated region
      $region33: #{conv_module_forward.1} parent=31 // pred_check
        %p442 = pneg %p100
      $region34: #{conv_module_forward.1} parent=31 // pred_check_branch
        %444 = sbr.rel (%p442) target = $region36
      $region35: #{conv_module_forward.1} parent=31 // pred_region
        _
      $region36: #{conv_module_forward.1} parent=31 // pred_fallthru
        _
    $region32: #{conv_module_forward.1} parent=5 // pred_fallthru
      _
    %p445 = scmp.le.s32.totalorder 2, %s9
    // Predicated region
    $region37: #{conv_module_forward.1} parent=5 // pred_check
      %p446 = pneg %p445
    $region38: #{conv_module_forward.1} parent=5 // pred_check_branch
      %448 = sbr.rel (%p446) target = $region40
    $region39: #{conv_module_forward.1} parent=5 // pred_region
      %s449 = ssub.s32 %s9, 2
      // Predicated region
      $region41: #{conv_module_forward.1} parent=39 // pred_check
        %p450 = pneg %p106
      $region42: #{conv_module_forward.1} parent=39 // pred_check_branch
        %452 = sbr.rel (%p450) target = $region44
      $region43: #{conv_module_forward.1} parent=39 // pred_region
        %p453 = scmp.lt.s32.totalorder %s15, 1
        %s454 = scalar_select %p453, %s15, 1
        %s455 = smul.addr %s454, 2
        %s456 = smul.addr %s455, 8
        %s457 = scalar_lea.vmem %s3, %s456
      $region44: #{conv_module_forward.1} parent=39 // pred_fallthru
        _
    $region40: #{conv_module_forward.1} parent=5 // pred_fallthru
      _
  $region6: #{conv_module_forward.1} parent=0 // loop_footer
    %s13 = sadd.s32 1, %s9
  $region7: #{conv_module_forward.1} parent=0 // loop_footer_branch
    %8 = sbr.rel target = $region3
  $region8: #{conv_module_forward.1} parent=0 // loop_exit
    _

</llo_original>
